<compile_context>
chip_gen: v5e
topology: v5e:2x2
jax: 0.10.0
libtpu: 0.0.40
codegen_flags: <defaults>
</compile_context>

<pallas_src>
import functools

import jax
import jax.numpy as jnp
from jax.experimental import pallas as pl
from jax.experimental.pallas import tpu as pltpu


def attention_kernel(lstm_ref, ua_ref, mask_ref, waw_ref, va_ref,
                     ctx_ref, attn_ref, *, ew_dtype, approx_recip):
    # lstm_ref : (TB, S, H)  ingress dtype (f32 or bf16)
    # ua_ref   : (TB, H)     f32, = prev_hidden @ Ua^T + (Wa.bias + Ua.bias)
    # mask_ref : (TB, S)     f32 (exactly 0/1)
    # waw_ref  : (H, H)      ingress dtype, Wa weight transposed
    # va_ref   : (1, H)      f32, Va weight row
    TB, S, H = lstm_ref.shape
    lstm = lstm_ref[...]                                        # (TB, S, H)

    # Wa(lstm_out): one (TB*S, H) x (H, H) MXU matmul per grid step.
    wa = jnp.dot(lstm.reshape(TB * S, H), waw_ref[...],
                 preferred_element_type=jnp.float32).reshape(TB, S, H)

    # Ua(prev) + fused biases precomputed in the wrapper; broadcast over S.
    pre = wa + ua_ref[...][:, None, :]                          # (TB, S, H) f32

    # tanh on the EUP; bf16 here halves EUP work on v6e/v7x (keep f32 on v5e).
    hidden = jnp.tanh(pre.astype(ew_dtype))                     # (TB, S, H)

    # Va projection: VPU multiply + lane reduction, f32 accumulate.
    scores = jnp.sum(hidden.astype(jnp.float32) * va_ref[...], axis=-1)  # (TB, S)

    # Masked softmax over the sequence axis (lane-dense, axis=-1).
    # NOTE: a fully-masked row yields NaN attention, matching PyTorch behavior.
    scores = jnp.where(mask_ref[...] == 0, -jnp.inf, scores)
    s_max = jnp.max(scores, axis=-1, keepdims=True)
    e = jnp.exp(scores - s_max)
    denom = jnp.sum(e, axis=-1, keepdims=True)
    attn = e * pl.reciprocal(denom, approx=approx_recip)        # (TB, S) f32

    # context[b] = sum_s attn[b, s] * lstm[b, s, :]  (broadcast-mul + reduce).
    ctx = jnp.sum(attn[:, :, None] * lstm.astype(jnp.float32), axis=1)   # (TB, H)

    ctx_ref[...] = ctx.astype(ctx_ref.dtype)
    attn_ref[...] = attn.astype(attn_ref.dtype)


def _pick_batch_tile(B, S, H, in_bytes, *, vmem_budget_bytes=12 << 20,
                     target_rows=1024):
    """Batch tile: aim for ~target_rows (TB*S) MXU/DMA rows per grid step,
    capped so the working set (double-buffered lstm tile + ~3 f32 temporaries
    of the same shape) stays inside the scoped-VMEM budget."""
    per_b = S * H * (2 * in_bytes + 3 * 4) + 4 * (2 * H + 2 * S)
    tb = min(max(1, vmem_budget_bytes // max(per_b, 1)),
             max(1, -(-target_rows // S)),
             B)
    if B > 8:
        tb = max(8, (tb // 8) * 8)   # sublane-aligned blocks for the 2-D refs
    else:
        tb = B                       # block == full batch dim (small-B case)
    return int(tb)


def attention_forward(lstm_out, prev_hidden, mask, params, *,
                      batch_tile=None,
                      compute_dtype=jnp.float32,      # bf16 recommended for prod
                      elementwise_dtype=None,         # bf16 on v6e/v7x, f32 on v5e
                      approx_recip=False,
                      vmem_budget_bytes=12 << 20,
                      vmem_limit_bytes=None):
    B, S, H = lstm_out.shape
    wa_w, wa_b, ua_w, ua_b, va_w, va_b = params
    del va_b  # Va.bias cancels in the softmax.

    in_dtype = jnp.dtype(compute_dtype)
    ew_dtype = jnp.dtype(elementwise_dtype) if elementwise_dtype is not None \
        else jnp.dtype(jnp.float32)

    # Hoisted out of the hot path: one tiny (B,H)x(H,H) XLA GEMM + fused bias.
    prev2d = prev_hidden.reshape(B, H).astype(jnp.float32)
    ua = prev2d @ ua_w.T.astype(jnp.float32) + (wa_b + ua_b)     # (B, H) f32

    lstm_in = lstm_out.astype(in_dtype)        # bf16 ingress halves HBM bytes
    waw = wa_w.T.astype(in_dtype)              # torch Linear computes x @ W^T
    va_row = va_w.reshape(1, H).astype(jnp.float32)
    mask_f = mask.astype(jnp.float32)

    TB = batch_tile if batch_tile is not None else _pick_batch_tile(
        B, S, H, in_dtype.itemsize, vmem_budget_bytes=vmem_budget_bytes)
    TB = max(1, min(int(TB), B))
    grid = (pl.cdiv(B, TB),)   # ragged last tile: OOB reads unused, writes dropped
    # TODO(synk): on v7x, cap TB at ceil(B/2) when B allows it so the "parallel"
    # batch axis can shard across the 2 TensorCores.

    itemsize = in_dtype.itemsize
    cost = pl.CostEstimate(
        flops=2 * B * S * H * H + 6 * B * S * H,
        transcendentals=B * S * H + 2 * B * S,
        bytes_accessed=(B * S * H * itemsize + H * H * itemsize
                        + 4 * (2 * B * H + 2 * B * S + H)),
    )

    cp_kwargs = dict(dimension_semantics=("parallel",))
    if vmem_limit_bytes is not None:
        cp_kwargs["vmem_limit_bytes"] = int(vmem_limit_bytes)

    kernel = functools.partial(attention_kernel,
                               ew_dtype=ew_dtype, approx_recip=approx_recip)
    full2 = lambda b: (0, 0)

    ctx, attn2d = pl.pallas_call(
        kernel,
        out_shape=(
            jax.ShapeDtypeStruct((B, H), jnp.float32),
            jax.ShapeDtypeStruct((B, S), jnp.float32),
        ),
        grid_spec=pltpu.PrefetchScalarGridSpec(
            num_scalar_prefetch=0,
            grid=grid,
            in_specs=[
                pl.BlockSpec((TB, S, H), lambda b: (b, 0, 0)),   # lstm_out tile
                pl.BlockSpec((TB, H), lambda b: (b, 0)),         # Ua(prev)+bias
                pl.BlockSpec((TB, S), lambda b: (b, 0)),         # mask
                pl.BlockSpec((H, H), full2),                     # Wa weight^T
                pl.BlockSpec((1, H), full2),                     # Va weight row
            ],
            out_specs=[
                pl.BlockSpec((TB, H), lambda b: (b, 0)),         # context
                pl.BlockSpec((TB, S), lambda b: (b, 0)),         # attn (lane-dense)
            ],
        ),
        compiler_params=pltpu.CompilerParams(**cp_kwargs),
        cost_estimate=cost,
    )(lstm_in, ua, mask_f, waw, va_row)

    # Match the torch output shapes: (B, H) context, (B, S, 1) attention.
    return ctx, attn2d.reshape(B, S, 1)


def init_params(key, hidden_size):
    ks = jax.random.split(key, 6)
    bound = 1.0 / jnp.sqrt(hidden_size)
    wa_w = jax.random.uniform(ks[0], (hidden_size, hidden_size), jnp.float32, -bound, bound)
    wa_b = jax.random.uniform(ks[1], (hidden_size,), jnp.float32, -bound, bound)
    ua_w = jax.random.uniform(ks[2], (hidden_size, hidden_size), jnp.float32, -bound, bound)
    ua_b = jax.random.uniform(ks[3], (hidden_size,), jnp.float32, -bound, bound)
    va_w = jax.random.uniform(ks[4], (1, hidden_size), jnp.float32, -bound, bound)
    va_b = jax.random.uniform(ks[5], (1,), jnp.float32, -bound, bound)
    return (wa_w, wa_b, ua_w, ua_b, va_w, va_b)


def reference_forward(lstm_out, prev_hidden, mask, params):
    # Pure-JAX reference mirroring the PyTorch forward exactly.
    wa_w, wa_b, ua_w, ua_b, va_w, va_b = params
    wa = lstm_out @ wa_w.T + wa_b                      # (B,S,H)
    ua = prev_hidden @ ua_w.T + ua_b                   # (B,1,H)
    scores = jnp.tanh(wa + ua) @ va_w.T + va_b         # (B,S,1)
    m = mask[:, :, None]
    scores = jnp.where(m == 0, -jnp.inf, scores)
    attn = jax.nn.softmax(scores, axis=1)              # (B,S,1)
    ctx = jnp.einsum('bsi,bsh->bih', attn, lstm_out)   # (B,1,H)
    return ctx[:, 0, :], attn


if __name__ == "__main__":
    B, S, H = 2, 8, 32
    key = jax.random.PRNGKey(0)
    k_p, k_x, k_h = jax.random.split(key, 3)

    params = init_params(k_p, H)
    lstm_out = jax.random.normal(k_x, (B, S, H), jnp.float32)
    prev_hidden = jax.random.normal(k_h, (B, 1, H), jnp.float32)
    # Deterministic padding mask: first batch fully valid, second batch last 3 masked.
    mask = jnp.ones((B, S), jnp.float32).at[1, S - 3:].set(0.0)

    ctx_ref_v, attn_ref_v = reference_forward(lstm_out, prev_hidden, mask, params)

    # 1) Exact f32 path.
    ctx, attn = attention_forward(lstm_out, prev_hidden, mask, params)
    jax.block_until_ready((ctx, attn))
    assert jnp.allclose(ctx, ctx_ref_v, atol=1e-4, rtol=1e-4)
    assert jnp.allclose(attn, attn_ref_v, atol=1e-4, rtol=1e-4)

    # 2) Production-style path: bf16 ingress + bf16 tanh + approx softmax recip
    #    (loose sanity check; bf16 rounding dominates the difference).
    ctx_bf, attn_bf = attention_forward(
        lstm_out, prev_hidden, mask, params,
        compute_dtype=jnp.bfloat16, elementwise_dtype=jnp.bfloat16,
        approx_recip=True)
    jax.block_until_ready((ctx_bf, attn_bf))
    assert float(jnp.max(jnp.abs(ctx_bf - ctx_ref_v))) < 0.1
    assert float(jnp.max(jnp.abs(attn_bf - attn_ref_v))) < 0.1

    print("KERNEL_OK")
</pallas_src>

<mosaic_0001>
module attributes {stable_mosaic.version = 11 : i64} {
  func.func @attention_kernel(%arg0: i32, %arg1: memref<2x8x32xf32, #tpu.memory_space<vmem>>, %arg2: memref<2x32xf32, #tpu.memory_space<vmem>>, %arg3: memref<2x8xf32, #tpu.memory_space<vmem>>, %arg4: memref<32x32xf32, #tpu.memory_space<vmem>>, %arg5: memref<1x32xf32, #tpu.memory_space<vmem>>, %arg6: memref<2x32xf32, #tpu.memory_space<vmem>>, %arg7: memref<2x8xf32, #tpu.memory_space<vmem>>) attributes {dimension_semantics = [#tpu.dimension_semantics<parallel>], iteration_bounds = array<i64: 1>, scalar_prefetch = 0 : i64, scratch_operands = 0 : i64, tpu.core_type = #tpu.core_type<tc>, window_params = [{transform_indices = @transform_0, window_bounds = array<i64: 2, 8, 32>}, {transform_indices = @transform_1, window_bounds = array<i64: 2, 32>}, {transform_indices = @transform_2, window_bounds = array<i64: 2, 8>}, {pipeline_mode = #tpu.pipeline_mode<synchronous>, transform_indices = @transform_3, window_bounds = array<i64: 32, 32>}, {pipeline_mode = #tpu.pipeline_mode<synchronous>, transform_indices = @transform_4, window_bounds = array<i64: 1, 32>}, {transform_indices = @transform_5, window_bounds = array<i64: 2, 32>}, {transform_indices = @transform_6, window_bounds = array<i64: 2, 8>}]} {
    %c0 = arith.constant 0 : index
    %c0_0 = arith.constant 0 : index
    %c0_1 = arith.constant 0 : index
    %0 = vector.load %arg1[%c0, %c0_0, %c0_1] : memref<2x8x32xf32, #tpu.memory_space<vmem>>, vector<2x8x32xf32>
    %1 = vector.shape_cast %0 : vector<2x8x32xf32> to vector<16x32xf32>
    %c0_2 = arith.constant 0 : index
    %c0_3 = arith.constant 0 : index
    %2 = vector.load %arg4[%c0_2, %c0_3] : memref<32x32xf32, #tpu.memory_space<vmem>>, vector<32x32xf32>
    %cst = arith.constant dense<0.000000e+00> : vector<16x32xf32>
    %3 = tpu.matmul %1, %2, %cst {dimension_numbers = #tpu.dot_dimension_numbers<[1], [0], [0], [1], [0, 0, 1, 1], [], []>} : vector<16x32xf32>, vector<32x32xf32>, vector<16x32xf32> -> vector<16x32xf32>
    %4 = vector.shape_cast %3 : vector<16x32xf32> to vector<2x8x32xf32>
    %c0_4 = arith.constant 0 : index
    %c0_5 = arith.constant 0 : index
    %5 = vector.load %arg2[%c0_4, %c0_5] : memref<2x32xf32, #tpu.memory_space<vmem>>, vector<2x32xf32>
    %6 = vector.shape_cast %5 : vector<2x32xf32> to vector<2x1x32xf32>
    %7 = vector.broadcast %6 : vector<2x1x32xf32> to vector<2x8x32xf32>
    %8 = arith.addf %4, %7 : vector<2x8x32xf32>
    %9 = math.tanh %8 : vector<2x8x32xf32>
    %c0_6 = arith.constant 0 : index
    %c0_7 = arith.constant 0 : index
    %10 = vector.load %arg5[%c0_6, %c0_7] : memref<1x32xf32, #tpu.memory_space<vmem>>, vector<1x32xf32>
    %11 = vector.shape_cast %10 : vector<1x32xf32> to vector<1x1x32xf32>
    %12 = vector.broadcast %11 : vector<1x1x32xf32> to vector<2x8x32xf32>
    %13 = arith.mulf %9, %12 : vector<2x8x32xf32>
    %cst_8 = arith.constant dense<0.000000e+00> : vector<2x8xf32>
    %14 = vector.multi_reduction <add>, %13, %cst_8 [2] : vector<2x8x32xf32> to vector<2x8xf32>
    %c0_9 = arith.constant 0 : index
    %c0_10 = arith.constant 0 : index
    %15 = vector.load %arg3[%c0_9, %c0_10] : memref<2x8xf32, #tpu.memory_space<vmem>>, vector<2x8xf32>
    %cst_11 = arith.constant 0.000000e+00 : f32
    %16 = vector.broadcast %cst_11 : f32 to vector<2x8xf32>
    %17 = arith.cmpf oeq, %15, %16 : vector<2x8xf32>
    %cst_12 = arith.constant 0xFF800000 : f32
    %18 = vector.broadcast %cst_12 : f32 to vector<2x8xf32>
    %19 = arith.select %17, %18, %14 : vector<2x8xi1>, vector<2x8xf32>
    %cst_13 = arith.constant dense<0xFF800000> : vector<2xf32>
    %20 = vector.multi_reduction <maximumf>, %19, %cst_13 [1] : vector<2x8xf32> to vector<2xf32>
    %21 = vector.shape_cast %20 : vector<2xf32> to vector<2x1xf32>
    %22 = vector.broadcast %21 : vector<2x1xf32> to vector<2x8xf32>
    %23 = arith.subf %19, %22 : vector<2x8xf32>
    %24 = math.exp %23 : vector<2x8xf32>
    %cst_14 = arith.constant dense<0.000000e+00> : vector<2xf32>
    %25 = vector.multi_reduction <add>, %24, %cst_14 [1] : vector<2x8xf32> to vector<2xf32>
    %26 = vector.shape_cast %25 : vector<2xf32> to vector<2x1xf32>
    %27 = tpu.reciprocal %26 : vector<2x1xf32> -> vector<2x1xf32>
    %28 = vector.broadcast %27 : vector<2x1xf32> to vector<2x8xf32>
    %29 = arith.mulf %24, %28 : vector<2x8xf32>
    %30 = vector.shape_cast %29 : vector<2x8xf32> to vector<2x8x1xf32>
    %31 = vector.broadcast %30 : vector<2x8x1xf32> to vector<2x8x32xf32>
    %32 = arith.mulf %31, %0 : vector<2x8x32xf32>
    %cst_15 = arith.constant dense<0.000000e+00> : vector<2x32xf32>
    %33 = vector.multi_reduction <add>, %32, %cst_15 [1] : vector<2x8x32xf32> to vector<2x32xf32>
    %c0_16 = arith.constant 0 : index
    %c0_17 = arith.constant 0 : index
    %34 = vector.load %arg6[%c0_16, %c0_17] : memref<2x32xf32, #tpu.memory_space<vmem>>, vector<2x32xf32>
    tpu.vector_store %arg6[%c0_16, %c0_17], %33 {strides = array<i32>} : memref<2x32xf32, #tpu.memory_space<vmem>>, vector<2x32xf32>,
    %c0_18 = arith.constant 0 : index
    %c0_19 = arith.constant 0 : index
    %35 = vector.load %arg7[%c0_18, %c0_19] : memref<2x8xf32, #tpu.memory_space<vmem>>, vector<2x8xf32>
    tpu.vector_store %arg7[%c0_18, %c0_19], %29 {strides = array<i32>} : memref<2x8xf32, #tpu.memory_space<vmem>>, vector<2x8xf32>,
    return
  }
  func.func @transform_0(%arg0: i32) -> (i32, i32, i32) {
    %c0_i32 = arith.constant 0 : i32
    %c0_i32_0 = arith.constant 0 : i32
    %c0_i32_1 = arith.constant 0 : i32
    return %arg0, %c0_i32, %c0_i32_0 : i32, i32, i32
  }
  func.func @transform_1(%arg0: i32) -> (i32, i32) {
    %c0_i32 = arith.constant 0 : i32
    %c0_i32_0 = arith.constant 0 : i32
    return %arg0, %c0_i32 : i32, i32
  }
  func.func @transform_2(%arg0: i32) -> (i32, i32) {
    %c0_i32 = arith.constant 0 : i32
    %c0_i32_0 = arith.constant 0 : i32
    return %arg0, %c0_i32 : i32, i32
  }
  func.func @transform_3(%arg0: i32) -> (i32, i32) {
    %c0_i32 = arith.constant 0 : i32
    %c0_i32_0 = arith.constant 0 : i32
    %c0_i32_1 = arith.constant 0 : i32
    return %c0_i32, %c0_i32_0 : i32, i32
  }
  func.func @transform_4(%arg0: i32) -> (i32, i32) {
    %c0_i32 = arith.constant 0 : i32
    %c0_i32_0 = arith.constant 0 : i32
    %c0_i32_1 = arith.constant 0 : i32
    return %c0_i32, %c0_i32_0 : i32, i32
  }
  func.func @transform_5(%arg0: i32) -> (i32, i32) {
    %c0_i32 = arith.constant 0 : i32
    %c0_i32_0 = arith.constant 0 : i32
    return %arg0, %c0_i32 : i32, i32
  }
  func.func @transform_6(%arg0: i32) -> (i32, i32) {
    %c0_i32 = arith.constant 0 : i32
    %c0_i32_0 = arith.constant 0 : i32
    return %arg0, %c0_i32 : i32, i32
  }
}

</mosaic_0001>

<llo_original>
// kernel: tpu_custom_call.1
$region0: #{tpu_custom_call.1}
  #allocation0 [shape = 'u32[]', space=smem, size = 0x4, offset = 0x4, fixed_abs, tag = 'smem constant byte address 0x4 - core index']
  #allocation1 [shape = 'u32[72,128]{1,0:T(1,128)}', space=vmem, size = 0x9000, scoped, tag = 'internal scratch']
  %s0 = inlined_call_operand.hbm [shape: f32[2,8,32], index: 0, kind: input, shape index: {}]
  %s1 = inlined_call_operand.hbm [shape: f32[2,32], index: 1, kind: input, shape index: {}]
  %s2 = inlined_call_operand.hbm [shape: f32[2,8], index: 2, kind: input, shape index: {}]
  %s3 = inlined_call_operand.hbm [shape: f32[32,32], index: 3, kind: input, shape index: {}]
  %s4 = inlined_call_operand.vmem [shape: f32[1,32], index: 4, kind: input, shape index: {}]
  %s5 = inlined_call_operand.hbm [shape: f32[2,32], index: 5, kind: output, shape index: {0}]
  %s6 = inlined_call_operand.hbm [shape: f32[2,8], index: 6, kind: output, shape index: {1}]
  %7 = xla_tuple %s5, %s6
  %s8 = sld [smem:[#allocation0]]
  $region54: #{tpu_custom_call.1} parent=0
    _
  %s10 = ssub.s32 1, %s8
  %s11 = scalar_select 0, %s10, %s8
  $region1: #{tpu_custom_call.1} parent=0
    #allocation2 [shape = 'u8[8192]{0}', space=vmem, size = 0x2000, scoped, tag = 'input window, operand 0, single buffered']
    #allocation3 [shape = 's32[1]{0}', space=sflag, size = 0x4, scoped, tag = 'scoped memory for tpu_custom_call.1']
    #allocation4 [shape = 's32[1]{0}', space=sflag, size = 0x4, scoped, tag = 'scoped memory for tpu_custom_call.1']
    #allocation5 [shape = 'u8[1024]{0}', space=vmem, size = 0x400, scoped, tag = 'input window, operand 1, single buffered']
    #allocation6 [shape = 's32[1]{0}', space=sflag, size = 0x4, scoped, tag = 'scoped memory for tpu_custom_call.1']
    #allocation7 [shape = 'u8[1024]{0}', space=vmem, size = 0x400, scoped, tag = 'input window, operand 2, single buffered']
    #allocation8 [shape = 'u8[16384]{0}', space=vmem, size = 0x4000, scoped, tag = 'input window, operand 3, single buffered']
    #allocation9 [shape = 's32[1]{0}', space=sflag, size = 0x4, scoped, tag = 'scoped memory for tpu_custom_call.1']
    #allocation10 [shape = 'u8[1024]{0}', space=vmem, size = 0x400, scoped, tag = 'output window, operand 0, single buffered']
    #allocation11 [shape = 'u8[1024]{0}', space=vmem, size = 0x400, scoped, tag = 'output window, operand 1, single buffered']
    #allocation12 [shape = 's32[1]{0}', space=sflag, size = 0x4, scoped, tag = 'scoped memory for tpu_custom_call.1']
    %12 = vsyncpa [#allocation3], 0
    %13 = vsyncpa [#allocation6], 0
    %14 = vsyncpa [#allocation9], 0
    %15 = vsyncpa [#allocation4], 0
    %16 = vsyncpa [#allocation12], 0
    // Predicated region
    $region2: #{tpu_custom_call.1} parent=1 // pred_check
      _
    $region3: #{tpu_custom_call.1} parent=1 // pred_check_branch
      %18 = sbr.rel (0) target = $region5
    $region4: #{tpu_custom_call.1} parent=1 // pred_region
      %20 = vsyncadd [#allocation3], 0
      %s21 = sshll.u32 %s0, 4
      %s22 = int_to_ptr.hbm [resolvable:$true] %s21
      %s23 = sshll.u32 [#allocation2], 4
      %s24 = int_to_ptr.vmem [resolvable:$true] %s23
      %29 = dma.hbm_to_vmem [thread:$0]  %s22, 256, %s24, [#allocation3], 128, 128, 8
    $region5: #{tpu_custom_call.1} parent=1 // pred_fallthru
      _
    // Predicated region
    $region6: #{tpu_custom_call.1} parent=1 // pred_check
      _
    $region7: #{tpu_custom_call.1} parent=1 // pred_check_branch
      %31 = sbr.rel (0) target = $region9
    $region8: #{tpu_custom_call.1} parent=1 // pred_region
      %33 = vsyncadd [#allocation6], 0
      %s35 = sshll.u32 %s1, 4
      %s36 = int_to_ptr.hbm [resolvable:$true] %s35
      %s37 = sshll.u32 [#allocation5], 4
      %s38 = int_to_ptr.vmem [resolvable:$true] %s37
      %40 = dma.hbm_to_vmem [thread:$0]  %s36, 32, %s38, [#allocation6]
    $region9: #{tpu_custom_call.1} parent=1 // pred_fallthru
      _
    // Predicated region
    $region10: #{tpu_custom_call.1} parent=1 // pred_check
      _
    $region11: #{tpu_custom_call.1} parent=1 // pred_check_branch
      %42 = sbr.rel (0) target = $region13
    $region12: #{tpu_custom_call.1} parent=1 // pred_region
      %44 = vsyncadd [#allocation6], 0
      %s46 = sshll.u32 %s2, 4
      %s47 = int_to_ptr.hbm [resolvable:$true] %s46
      %s48 = sshll.u32 [#allocation7], 4
      %s49 = int_to_ptr.vmem [resolvable:$true] %s48
      %51 = dma.hbm_to_vmem [thread:$0]  %s47, 32, %s49, [#allocation6]
    $region13: #{tpu_custom_call.1} parent=1 // pred_fallthru
      _
    // Predicated region
    $region14: #{tpu_custom_call.1} parent=1 // pred_check
      _
    $region15: #{tpu_custom_call.1} parent=1 // pred_check_branch
      %53 = sbr.rel (0) target = $region17
    $region16: #{tpu_custom_call.1} parent=1 // pred_region
      %55 = vsyncadd [#allocation9], 0
      %s56 = sshll.u32 %s3, 4
      %s57 = int_to_ptr.hbm [resolvable:$true] %s56
      %s58 = sshll.u32 [#allocation8], 4
      %s59 = int_to_ptr.vmem [resolvable:$true] %s58
      %64 = dma.hbm_to_vmem [thread:$0]  %s57, 512, %s59, [#allocation9], 128, 128, 8
    $region17: #{tpu_custom_call.1} parent=1 // pred_fallthru
      _
    // Predicated region
    $region18: #{tpu_custom_call.1} parent=1 // pred_check
      _
    $region19: #{tpu_custom_call.1} parent=1 // pred_check_branch
      %66 = sbr.rel (0) target = $region21
    $region20: #{tpu_custom_call.1} parent=1 // pred_region
      _
    $region21: #{tpu_custom_call.1} parent=1 // pred_fallthru
      _
    // Predicated region
    $region22: #{tpu_custom_call.1} parent=1 // pred_check
      _
    $region23: #{tpu_custom_call.1} parent=1 // pred_check_branch
      %68 = sbr.rel (0) target = $region25
    $region24: #{tpu_custom_call.1} parent=1 // pred_region
      %70 = dma.done [#allocation3], 256
    $region25: #{tpu_custom_call.1} parent=1 // pred_fallthru
      _
    // Predicated region
    $region26: #{tpu_custom_call.1} parent=1 // pred_check
      _
    $region27: #{tpu_custom_call.1} parent=1 // pred_check_branch
      %72 = sbr.rel (0) target = $region29
    $region28: #{tpu_custom_call.1} parent=1 // pred_region
      %74 = dma.done [#allocation6], 32
    $region29: #{tpu_custom_call.1} parent=1 // pred_fallthru
      _
    // Predicated region
    $region30: #{tpu_custom_call.1} parent=1 // pred_check
      _
    $region31: #{tpu_custom_call.1} parent=1 // pred_check_branch
      %76 = sbr.rel (0) target = $region33
    $region32: #{tpu_custom_call.1} parent=1 // pred_region
      %78 = dma.done [#allocation6], 32
    $region33: #{tpu_custom_call.1} parent=1 // pred_fallthru
      _
    // Predicated region
    $region34: #{tpu_custom_call.1} parent=1 // pred_check
      _
    $region35: #{tpu_custom_call.1} parent=1 // pred_check_branch
      %80 = sbr.rel (0) target = $region37
    $region36: #{tpu_custom_call.1} parent=1 // pred_region
      %82 = dma.done [#allocation9], 512
    $region37: #{tpu_custom_call.1} parent=1 // pred_fallthru
      _
    %v83 = vld [vmem:[#allocation2] sm:$0xff]
    %v84 = vld [vmem:[#allocation2 + $0x8] sm:$0xff]
    %v85 = vld [vmem:[#allocation8] sm:$0xff]
    %v86 = vld [vmem:[#allocation8 + $0x8] sm:$0xff]
    %v87 = vld [vmem:[#allocation8 + $0x10] sm:$0xff]
    %v88 = vld [vmem:[#allocation8 + $0x18] sm:$0xff]
    %vm89 = vcmask 261120
    %v91 = vsel %vm89, %v83, 0
    %v94 = vsel %vm89, %v84, 0
    %96 = vmatpush.msra.mxu0 0.0
    %97 = vmatpush.msra.mxu0 0.0
    %98 = vmatpush.msra.mxu0 0.0
    %99 = vmatpush.msra.mxu0 0.0
    %100 = vmatpush.msra.mxu0 0.0
    %101 = vmatpush.msra.mxu0 0.0
    %102 = vmatpush.msra.mxu0 0.0
    %103 = vmatpush.msra.mxu0 0.0
    %104 = vmatpush.msra.mxu0 0.0
    %105 = vmatpush.msra.mxu0 0.0
    %106 = vmatpush.msra.mxu0 0.0
    %107 = vmatpush.msra.mxu0 0.0
    %108 = vmatpush.msra.mxu0 %v88
    %109 = vmatpush.msra.mxu0 %v87
    %110 = vmatpush.msra.mxu0 %v86
    %111 = vmatpush.msra.mxu0 %v85
    %112 = vmatmul.f32.gmra.mxu0 %v91
    %v113 = vpop.f32.mrf.mxu0
    %v114 = vadd.f32 0.0, %v113
    %115 = vmatmul.f32.gmra.mxu0 %v94
    %v116 = vpop.f32.mrf.mxu0
    %v117 = vadd.f32 0.0, %v116
    %118 = vdwg.mxu0
    %v119 = vld [vmem:[#allocation5] sm:$0x3]
    %v121 = vrot.slane %v119, 1
    %v122 = vperm.slane %v119, 0
    %v123 = vperm.slane %v121, 0
    %v126 = vadd.f32 %v114, %v122
    %v127 = vadd.f32 %v117, %v123
    %v128 = vtanh.pop %v126
    %v129 = vtanh.pop %v127
    %v130 = vld [vmem:[%s4] sm:$0x1]
    %v132 = vperm.slane %v130, 0
    %v134 = vmul.f32 %v128, %v132
    %v135 = vmul.f32 %v129, %v132
    %v136 = vsel %vm89, %v134, 0.0
    %137 = vadd.xlane.f32.xlu0 %v136
    %v138 = vpop.xlane.xlu0 %137
    %v139 = vsel %vm89, %v135, 0.0
    %140 = vadd.xlane.f32.xlu0 %v139
    %v141 = vpop.xlane.xlu0 %140
    %v142 = vld [vmem:[#allocation7] sm:$0x3]
    %vm143 = vcmp.eq.f32.partialorder %v142, 0.0
    %v146 = vlaneseq
    %v147 = vand.u32 %v146, 127
    %v148 = vperm.slane %v138, %v147
    %v149 = vperm.slane %v141, %v147
    %vm150 = vcmask 1041409
    %v151 = vsel %vm150, %v149, %v148
    %v153 = vsel %vm143, -inf, %v151
    %vm154 = vcmask 58368
    %v155 = vsel %vm154, %v153, -inf
    %156 = vmax.xlane.f32.xlu0 %v155
    %v157 = vpop.xlane.xlu0 %156
    %v158 = vsub.f32 %v153, %v157
    %v159 = vmul.f32 %v158, 1.442695
    %v160 = vpow.pop %v159
    %v161 = vsel %vm154, %v160, 0.0
    %162 = vadd.xlane.f32.xlu0 %v161
    %v163 = vpop.xlane.xlu0 %162
    %v164 = vrcp.pop %v163
    %v165 = vmul.f32 %v163, %v164
    %v166 = vsub.f32 1.0, %v165
    %v167 = vmul.f32 %v164, %v166
    %v168 = vadd.f32 %v164, %v167
    %vm169 = vweird.f32 %v163
    %vm170 = vweird.f32 %v164
    %vm171 = vmor %vm169, %vm170
    %v172 = vsel %vm171, %v164, %v168
    %v173 = vand.u32 2147483647, %v163
    %vm174 = vcmp.eq.f32.partialorder %v173, 8.507059e+37
    %v175 = vand.u32 %v163, 2147483648
    %v176 = vor.u32 1.1754944e-38, %v175
    %v177 = vsel %vm174, %v176, %v172
    %v178 = vmul.f32 %v160, %v177
    %v179 = vperm.slane %v178, 0
    %v180 = vlaneseq
    %v181 = vshrl.u32 %v180, 7
    %183 = vset.pattern.permute.xlu0 %v181
    %184 = vperm.xlu0 %183, %v179
    %v185 = vpop.permute.xlu0 %184
    %v186 = vperm.slane %v178, 1
    %v187 = vlaneseq
    %v188 = vshrl.u32 %v187, 7
    %190 = vset.pattern.permute.xlu0 %v188
    %191 = vperm.xlu0 %190, %v186
    %v192 = vpop.permute.xlu0 %191
    %v193 = vmul.f32 %v185, %v83
    %v194 = vmul.f32 %v192, %v84
    %v195 = vsel %vm89, %v193, 0.0
    %v196 = vrot.slane %v195, 4
    %v197 = vadd.f32 %v195, %v196
    %v198 = vrot.slane %v197, 2
    %v199 = vadd.f32 %v197, %v198
    %v200 = vrot.slane %v199, 1
    %v201 = vadd.f32 %v199, %v200
    %v202 = vsel %vm89, %v194, 0.0
    %v203 = vrot.slane %v202, 4
    %v204 = vadd.f32 %v202, %v203
    %v205 = vrot.slane %v204, 2
    %v206 = vadd.f32 %v204, %v205
    %v207 = vrot.slane %v206, 1
    %v208 = vadd.f32 %v206, %v207
    %v211 = vsel %vm150, %v208, %v201
    %vm213 = vcmask 254976
    %214 = vst.msk [vmem:[#allocation10] sm:$0x3] %vm213, %v211
    %215 = vst.msk [vmem:[#allocation11] sm:$0x3] %vm154, %v178
    // Predicated region
    $region38: #{tpu_custom_call.1} parent=1 // pred_check
      _
    $region39: #{tpu_custom_call.1} parent=1 // pred_check_branch
      %217 = sbr.rel (0) target = $region41
    $region40: #{tpu_custom_call.1} parent=1 // pred_region
      %219 = vsyncadd [#allocation4], 0
      %s221 = sshll.u32 [#allocation10], 4
      %s222 = int_to_ptr.vmem [resolvable:$true] %s221
      %s223 = sshll.u32 %s5, 4
      %s224 = int_to_ptr.hbm [resolvable:$true] %s223
      %226 = dma.vmem_to_hbm [thread:$0]  %s222, 32, %s224, [#allocation4]
    $region41: #{tpu_custom_call.1} parent=1 // pred_fallthru
      _
    // Predicated region
    $region42: #{tpu_custom_call.1} parent=1 // pred_check
      _
    $region43: #{tpu_custom_call.1} parent=1 // pred_check_branch
      %228 = sbr.rel (0) target = $region45
    $region44: #{tpu_custom_call.1} parent=1 // pred_region
      %230 = vsyncadd [#allocation12], 0
      %s232 = sshll.u32 [#allocation11], 4
      %s233 = int_to_ptr.vmem [resolvable:$true] %s232
      %s234 = sshll.u32 %s6, 4
      %s235 = int_to_ptr.hbm [resolvable:$true] %s234
      %237 = dma.vmem_to_hbm [thread:$0]  %s233, 32, %s235, [#allocation12]
    $region45: #{tpu_custom_call.1} parent=1 // pred_fallthru
      _
    // Predicated region
    $region46: #{tpu_custom_call.1} parent=1 // pred_check
      _
    $region47: #{tpu_custom_call.1} parent=1 // pred_check_branch
      %239 = sbr.rel (0) target = $region49
    $region48: #{tpu_custom_call.1} parent=1 // pred_region
      %241 = dma.done [#allocation4], 32
    $region49: #{tpu_custom_call.1} parent=1 // pred_fallthru
      _
    // Predicated region
    $region50: #{tpu_custom_call.1} parent=1 // pred_check
      _
    $region51: #{tpu_custom_call.1} parent=1 // pred_check_branch
      %243 = sbr.rel (0) target = $region53
    $region52: #{tpu_custom_call.1} parent=1 // pred_region
      %245 = dma.done [#allocation12], 32
    $region53: #{tpu_custom_call.1} parent=1 // pred_fallthru
      _
    %246 = vsyncpa [#allocation3], 1
    %247 = vsyncpa [#allocation6], 1
    %248 = vsyncpa [#allocation9], 1
    %249 = vsyncpa [#allocation4], 1
    %250 = vsyncpa [#allocation12], 1

</llo_original>
